<compile_context>
chip_gen: v5e
topology: v5e:2x2
jax: 0.10.0
libtpu: 0.0.40
codegen_flags: <defaults>
</compile_context>

<pallas_src>
import jax
import jax.numpy as jnp
from jax.experimental import pallas as pl
from jax.experimental.pallas import tpu as pltpu

IN_DIM = 100
HID_DIM = 64
OUT_DIM = 1
TILE_B = 2048  # default batch tile; auto-shrunk for small batches


def attack_kernel(x_ref, w1_ref, b1_ref, w2_ref, b2_ref, o_ref):
    # Layer 1: Linear(100 -> 64) on the MXU (f32 accumulation) + ReLU (VPU).
    h = jnp.dot(x_ref[...], w1_ref[...], preferred_element_type=jnp.float32)
    h = jnp.maximum(h + b1_ref[...], 0.0)                      # (TILE_B, 64)

    # Layer 2: Linear(64 -> 1). N == 1, so skip the MXU: VPU multiply against
    # the (1, 64) w2 row + a lane reduction (XLU).
    z = jnp.sum(h * w2_ref[...], axis=-1, keepdims=True)       # (TILE_B, 1)

    # Relayout to lane-dense (1, TILE_B) BEFORE the sigmoid/store epilogue so
    # the EUP and the store slot see full vregs instead of 1 valid lane in 128.
    zt = jnp.transpose(z) + b2_ref[0]                           # (1, TILE_B)

    # Sigmoid: exp on the EUP; exact reciprocal keeps 1e-5 parity with the f32
    # reference (pass approx=True to also push the divide onto the EUP).
    o_ref[...] = pl.reciprocal(1.0 + jnp.exp(-zt), approx=False)


def inference_attack(x, w1, b1, w2, b2, *, tile_b=TILE_B):
    """x: [B, IN_DIM]; w1: [IN_DIM, HID_DIM]; b1: [1, HID_DIM];
    w2: [HID_DIM, OUT_DIM]; b2: [1, OUT_DIM]. Returns [B, OUT_DIM] float32."""
    B = x.shape[0]

    # Keep the tile a multiple of 128 (lane-dense output block tiling rule) and
    # of 8 (x-block sublane rule); don't over-tile tiny batches.
    tile_b = max(128, min(tile_b, pl.cdiv(B, 128) * 128))
    n_tiles = pl.cdiv(B, tile_b)
    b_pad = n_tiles * tile_b
    if b_pad != B:
        # Pad the tail tile; the extra rows are computed and discarded below.
        x = jnp.pad(x, ((0, b_pad - B), (0, 0)))

    w2_row = w2.reshape(1, HID_DIM)                 # (1, 64) for VPU broadcast
    b2_scalar = b2.reshape(1).astype(jnp.float32)   # single scalar -> SMEM

    cost = pl.CostEstimate(
        flops=2 * b_pad * IN_DIM * HID_DIM + 2 * b_pad * HID_DIM,
        transcendentals=b_pad,
        bytes_accessed=4 * (b_pad * IN_DIM + b_pad
                            + IN_DIM * HID_DIM + 2 * HID_DIM + 1),
    )

    out = pl.pallas_call(
        attack_kernel,
        out_shape=jax.ShapeDtypeStruct((1, b_pad), jnp.float32),
        grid=(n_tiles,),
        in_specs=[
            # Streamed batch tile of x (pipelined HBM -> VMEM).
            pl.BlockSpec((tile_b, IN_DIM), lambda i: (i, 0)),
            # Weights / biases: constant index_map -> stay resident in VMEM.
            pl.BlockSpec((IN_DIM, HID_DIM), lambda i: (0, 0)),
            pl.BlockSpec((1, HID_DIM), lambda i: (0, 0)),
            pl.BlockSpec((1, HID_DIM), lambda i: (0, 0)),
            # b2 is one scalar: keep it in SMEM, not a (1, 1) VMEM tile.
            pl.BlockSpec(memory_space=pltpu.MemorySpace.SMEM),
        ],
        # Lane-dense output: (1, b_pad) with a (1, tile_b) block per grid step.
        out_specs=pl.BlockSpec((1, tile_b), lambda i: (0, i)),
        compiler_params=pltpu.CompilerParams(
            # Batch tiles are independent -> megacore sharding on v7x.
            dimension_semantics=("parallel",),
        ),
        cost_estimate=cost,
    )(x, w1, b1, w2_row, b2_scalar)

    # Undo the lane-dense layout (layout plumbing only, no compute).
    return out[0, :B].reshape(B, OUT_DIM)


def init_params(key):
    # Matches the torch init: weights ~ N(0, 0.01), biases = 0.
    k1, k2 = jax.random.split(key)
    w1 = 0.01 * jax.random.normal(k1, (IN_DIM, HID_DIM), dtype=jnp.float32)
    b1 = jnp.zeros((1, HID_DIM), dtype=jnp.float32)
    w2 = 0.01 * jax.random.normal(k2, (HID_DIM, OUT_DIM), dtype=jnp.float32)
    b2 = jnp.zeros((1, OUT_DIM), dtype=jnp.float32)
    return w1, b1, w2, b2


def reference(x, w1, b1, w2, b2):
    h = jnp.maximum(x @ w1 + b1, 0.0)
    return jax.nn.sigmoid(h @ w2 + b2)


if __name__ == "__main__":
    key = jax.random.PRNGKey(0)
    kx, kp = jax.random.split(key)

    B = 8  # small demo batch; exercises the tail-padding path (B < tile)
    x = jax.random.normal(kx, (B, IN_DIM), dtype=jnp.float32)
    w1, b1, w2, b2 = init_params(kp)

    out = inference_attack(x, w1, b1, w2, b2)
    out = jax.block_until_ready(out)

    ref = reference(x, w1, b1, w2, b2)
    assert out.shape == (B, OUT_DIM)
    assert jnp.allclose(out, ref, atol=1e-5, rtol=1e-5)

    print("KERNEL_OK")
</pallas_src>

<mosaic_0001>
module attributes {stable_mosaic.version = 11 : i64} {
  func.func @attack_kernel(%arg0: i32, %arg1: memref<128x100xf32, #tpu.memory_space<vmem>>, %arg2: memref<100x64xf32, #tpu.memory_space<vmem>>, %arg3: memref<1x64xf32, #tpu.memory_space<vmem>>, %arg4: memref<1x64xf32, #tpu.memory_space<vmem>>, %arg5: memref<1xf32, #tpu.memory_space<smem>>, %arg6: memref<1x128xf32, #tpu.memory_space<vmem>>) attributes {dimension_semantics = [#tpu.dimension_semantics<parallel>], iteration_bounds = array<i64: 1>, scalar_prefetch = 0 : i64, scratch_operands = 0 : i64, tpu.core_type = #tpu.core_type<tc>, window_params = [{transform_indices = @transform_0, window_bounds = array<i64: 128, 100>}, {pipeline_mode = #tpu.pipeline_mode<synchronous>, transform_indices = @transform_1, window_bounds = array<i64: 100, 64>}, {pipeline_mode = #tpu.pipeline_mode<synchronous>, transform_indices = @transform_2, window_bounds = array<i64: 1, 64>}, {pipeline_mode = #tpu.pipeline_mode<synchronous>, transform_indices = @transform_3, window_bounds = array<i64: 1, 64>}, {transform_indices = @transform_4, window_bounds = array<i64: 1>}, {transform_indices = @transform_5, window_bounds = array<i64: 1, 128>}]} {
    %c0 = arith.constant 0 : index
    %c0_0 = arith.constant 0 : index
    %0 = vector.load %arg1[%c0, %c0_0] : memref<128x100xf32, #tpu.memory_space<vmem>>, vector<128x100xf32>
    %c0_1 = arith.constant 0 : index
    %c0_2 = arith.constant 0 : index
    %1 = vector.load %arg2[%c0_1, %c0_2] : memref<100x64xf32, #tpu.memory_space<vmem>>, vector<100x64xf32>
    %cst = arith.constant dense<0.000000e+00> : vector<128x64xf32>
    %2 = tpu.matmul %0, %1, %cst {dimension_numbers = #tpu.dot_dimension_numbers<[1], [0], [0], [1], [0, 0, 1, 1], [], []>} : vector<128x100xf32>, vector<100x64xf32>, vector<128x64xf32> -> vector<128x64xf32>
    %c0_3 = arith.constant 0 : index
    %c0_4 = arith.constant 0 : index
    %3 = vector.load %arg3[%c0_3, %c0_4] : memref<1x64xf32, #tpu.memory_space<vmem>>, vector<1x64xf32>
    %4 = vector.broadcast %3 : vector<1x64xf32> to vector<128x64xf32>
    %5 = arith.addf %2, %4 : vector<128x64xf32>
    %cst_5 = arith.constant 0.000000e+00 : f32
    %6 = vector.broadcast %cst_5 : f32 to vector<128x64xf32>
    %7 = arith.maximumf %5, %6 : vector<128x64xf32>
    %c0_6 = arith.constant 0 : index
    %c0_7 = arith.constant 0 : index
    %8 = vector.load %arg4[%c0_6, %c0_7] : memref<1x64xf32, #tpu.memory_space<vmem>>, vector<1x64xf32>
    %9 = vector.broadcast %8 : vector<1x64xf32> to vector<128x64xf32>
    %10 = arith.mulf %7, %9 : vector<128x64xf32>
    %cst_8 = arith.constant dense<0.000000e+00> : vector<128xf32>
    %11 = vector.multi_reduction <add>, %10, %cst_8 [1] : vector<128x64xf32> to vector<128xf32>
    %12 = vector.shape_cast %11 : vector<128xf32> to vector<128x1xf32>
    %13 = tpu.transpose %12, [1, 0] : vector<128x1xf32> -> vector<1x128xf32>
    %c0_9 = arith.constant 0 : index
    %14 = memref.load %arg5[%c0_9] : memref<1xf32, #tpu.memory_space<smem>>
    %15 = vector.broadcast %14 : f32 to vector<1x128xf32>
    %16 = arith.addf %13, %15 : vector<1x128xf32>
    %cst_10 = arith.constant 0.000000e+00 : f32
    %17 = vector.broadcast %cst_10 : f32 to vector<1x128xf32>
    %18 = arith.subf %17, %16 : vector<1x128xf32>
    %19 = math.exp %18 : vector<1x128xf32>
    %cst_11 = arith.constant 1.000000e+00 : f32
    %20 = vector.broadcast %cst_11 : f32 to vector<1x128xf32>
    %21 = arith.addf %20, %19 : vector<1x128xf32>
    %22 = tpu.reciprocal %21 : vector<1x128xf32> -> vector<1x128xf32>
    %c0_12 = arith.constant 0 : index
    %c0_13 = arith.constant 0 : index
    %23 = vector.load %arg6[%c0_12, %c0_13] : memref<1x128xf32, #tpu.memory_space<vmem>>, vector<1x128xf32>
    tpu.vector_store %arg6[%c0_12, %c0_13], %22 {strides = array<i32>} : memref<1x128xf32, #tpu.memory_space<vmem>>, vector<1x128xf32>,
    return
  }
  func.func @transform_0(%arg0: i32) -> (i32, i32) {
    %c0_i32 = arith.constant 0 : i32
    %c0_i32_0 = arith.constant 0 : i32
    return %arg0, %c0_i32 : i32, i32
  }
  func.func @transform_1(%arg0: i32) -> (i32, i32) {
    %c0_i32 = arith.constant 0 : i32
    %c0_i32_0 = arith.constant 0 : i32
    %c0_i32_1 = arith.constant 0 : i32
    return %c0_i32, %c0_i32_0 : i32, i32
  }
  func.func @transform_2(%arg0: i32) -> (i32, i32) {
    %c0_i32 = arith.constant 0 : i32
    %c0_i32_0 = arith.constant 0 : i32
    %c0_i32_1 = arith.constant 0 : i32
    return %c0_i32, %c0_i32_0 : i32, i32
  }
  func.func @transform_3(%arg0: i32) -> (i32, i32) {
    %c0_i32 = arith.constant 0 : i32
    %c0_i32_0 = arith.constant 0 : i32
    %c0_i32_1 = arith.constant 0 : i32
    return %c0_i32, %c0_i32_0 : i32, i32
  }
  func.func @transform_4(%arg0: i32) -> i32 {
    %c0_i32 = arith.constant 0 : i32
    %c0_i32_0 = arith.constant 0 : i32
    return %c0_i32 : i32
  }
  func.func @transform_5(%arg0: i32) -> (i32, i32) {
    %c0_i32 = arith.constant 0 : i32
    %c0_i32_0 = arith.constant 0 : i32
    return %c0_i32, %arg0 : i32, i32
  }
}

</mosaic_0001>

<llo_original>
// kernel: tpu_custom_call.1
$region0: #{tpu_custom_call.1}
  #allocation0 [shape = 'u32[]', space=smem, size = 0x4, offset = 0x4, fixed_abs, tag = 'smem constant byte address 0x4 - core index']
  #allocation1 [shape = 'u32[72,128]{1,0:T(1,128)}', space=vmem, size = 0x9000, scoped, tag = 'internal scratch']
  #allocation2 [shape = 'f32[1]{0:T(128)S(6)}', space=smem, size = 0x200, scoped, tag = 'scoped memory for tpu_custom_call.1']
  %s0 = inlined_call_operand.vmem [shape: f32[128,100], index: 0, kind: input, shape index: {}]
  %s1 = inlined_call_operand.vmem [shape: f32[100,64], index: 1, kind: input, shape index: {}]
  %s2 = inlined_call_operand.vmem [shape: f32[1,64], index: 2, kind: input, shape index: {}]
  %s3 = inlined_call_operand.vmem [shape: f32[1,64], index: 3, kind: input, shape index: {}]
  %s4 = inlined_call_operand.<no memory space> [shape: f32[1], index: 4, kind: input, shape index: {}]
  %s5 = inlined_call_operand.hbm [shape: f32[1,128], index: 5, kind: output, shape index: {}]
  %s6 = sld [smem:[#allocation0]]
  $region30: #{tpu_custom_call.1} parent=0
    _
  %s8 = ssub.s32 1, %s6
  %s9 = scalar_select 0, %s8, %s6
  %10 = sst [smem:[#allocation2]] %s4
  $region1: #{tpu_custom_call.1} parent=0
    #allocation3 [shape = 'u8[512]{0}', space=vmem, size = 0x400, scoped, tag = 'output window, operand 0, single buffered']
    #allocation4 [shape = 's32[1]{0}', space=sflag, size = 0x4, scoped, tag = 'scoped memory for tpu_custom_call.1']
    %11 = vsyncpa [#allocation4], 0
    // Predicated region
    $region2: #{tpu_custom_call.1} parent=1 // pred_check
      _
    $region3: #{tpu_custom_call.1} parent=1 // pred_check_branch
      %13 = sbr.rel (0) target = $region5
    $region4: #{tpu_custom_call.1} parent=1 // pred_region
      _
    $region5: #{tpu_custom_call.1} parent=1 // pred_fallthru
      _
    // Predicated region
    $region6: #{tpu_custom_call.1} parent=1 // pred_check
      _
    $region7: #{tpu_custom_call.1} parent=1 // pred_check_branch
      %15 = sbr.rel (0) target = $region9
    $region8: #{tpu_custom_call.1} parent=1 // pred_region
      _
    $region9: #{tpu_custom_call.1} parent=1 // pred_fallthru
      _
    // Predicated region
    $region10: #{tpu_custom_call.1} parent=1 // pred_check
      _
    $region11: #{tpu_custom_call.1} parent=1 // pred_check_branch
      %17 = sbr.rel (0) target = $region13
    $region12: #{tpu_custom_call.1} parent=1 // pred_region
      _
    $region13: #{tpu_custom_call.1} parent=1 // pred_fallthru
      _
    // Predicated region
    $region14: #{tpu_custom_call.1} parent=1 // pred_check
      _
    $region15: #{tpu_custom_call.1} parent=1 // pred_check_branch
      %19 = sbr.rel (0) target = $region17
    $region16: #{tpu_custom_call.1} parent=1 // pred_region
      _
    $region17: #{tpu_custom_call.1} parent=1 // pred_fallthru
      _
    // Predicated region
    $region18: #{tpu_custom_call.1} parent=1 // pred_check
      _
    $region19: #{tpu_custom_call.1} parent=1 // pred_check_branch
      %21 = sbr.rel (0) target = $region21
    $region20: #{tpu_custom_call.1} parent=1 // pred_region
      _
    $region21: #{tpu_custom_call.1} parent=1 // pred_fallthru
      _
    %v22 = vld [vmem:[%s0] sm:$0xff]
    %v23 = vld [vmem:[%s0 + $0x8] sm:$0xff]
    %v24 = vld [vmem:[%s0 + $0x10] sm:$0xff]
    %v25 = vld [vmem:[%s0 + $0x18] sm:$0xff]
    %v26 = vld [vmem:[%s0 + $0x20] sm:$0xff]
    %v27 = vld [vmem:[%s0 + $0x28] sm:$0xff]
    %v28 = vld [vmem:[%s0 + $0x30] sm:$0xff]
    %v29 = vld [vmem:[%s0 + $0x38] sm:$0xff]
    %v30 = vld [vmem:[%s0 + $0x40] sm:$0xff]
    %v31 = vld [vmem:[%s0 + $0x48] sm:$0xff]
    %v32 = vld [vmem:[%s0 + $0x50] sm:$0xff]
    %v33 = vld [vmem:[%s0 + $0x58] sm:$0xff]
    %v34 = vld [vmem:[%s0 + $0x60] sm:$0xff]
    %v35 = vld [vmem:[%s0 + $0x68] sm:$0xff]
    %v36 = vld [vmem:[%s0 + $0x70] sm:$0xff]
    %v37 = vld [vmem:[%s0 + $0x78] sm:$0xff]
    %v38 = vld [vmem:[%s1] sm:$0xff]
    %v39 = vld [vmem:[%s1 + $0x8] sm:$0xff]
    %v40 = vld [vmem:[%s1 + $0x10] sm:$0xff]
    %v41 = vld [vmem:[%s1 + $0x18] sm:$0xff]
    %v42 = vld [vmem:[%s1 + $0x20] sm:$0xff]
    %v43 = vld [vmem:[%s1 + $0x28] sm:$0xff]
    %v44 = vld [vmem:[%s1 + $0x30] sm:$0xff]
    %v45 = vld [vmem:[%s1 + $0x38] sm:$0xff]
    %v46 = vld [vmem:[%s1 + $0x40] sm:$0xff]
    %v47 = vld [vmem:[%s1 + $0x48] sm:$0xff]
    %v48 = vld [vmem:[%s1 + $0x50] sm:$0xff]
    %v49 = vld [vmem:[%s1 + $0x58] sm:$0xff]
    %v50 = vld [vmem:[%s1 + $0x60] sm:$0xf]
    %v51 = vld [vmem:[%s2] sm:$0x1]
    %v53 = vperm.slane %v51, 0
    %vm55 = vcmask 818176
    %v57 = vsel %vm55, %v22, 0
    %v60 = vsel %vm55, %v23, 0
    %v63 = vsel %vm55, %v24, 0
    %v66 = vsel %vm55, %v25, 0
    %v69 = vsel %vm55, %v26, 0
    %v72 = vsel %vm55, %v27, 0
    %v75 = vsel %vm55, %v28, 0
    %v78 = vsel %vm55, %v29, 0
    %v81 = vsel %vm55, %v30, 0
    %v84 = vsel %vm55, %v31, 0
    %v87 = vsel %vm55, %v32, 0
    %v90 = vsel %vm55, %v33, 0
    %v93 = vsel %vm55, %v34, 0
    %v96 = vsel %vm55, %v35, 0
    %v99 = vsel %vm55, %v36, 0
    %v102 = vsel %vm55, %v37, 0
    %vm104 = vcmask 1043456
    %v106 = vsel %vm104, %v50, 0
    %108 = vmatpush.msra.mxu0 0.0
    %109 = vmatpush.msra.mxu0 0.0
    %110 = vmatpush.msra.mxu0 0.0
    %111 = vmatpush.msra.mxu0 %v106
    %112 = vmatpush.msra.mxu0 %v49
    %113 = vmatpush.msra.mxu0 %v48
    %114 = vmatpush.msra.mxu0 %v47
    %115 = vmatpush.msra.mxu0 %v46
    %116 = vmatpush.msra.mxu0 %v45
    %117 = vmatpush.msra.mxu0 %v44
    %118 = vmatpush.msra.mxu0 %v43
    %119 = vmatpush.msra.mxu0 %v42
    %120 = vmatpush.msra.mxu0 %v41
    %121 = vmatpush.msra.mxu0 %v40
    %122 = vmatpush.msra.mxu0 %v39
    %123 = vmatpush.msra.mxu0 %v38
    %124 = vmatmul.f32.gmra.mxu0 %v57
    %v125 = vpop.f32.mrf.mxu0
    %v126 = vadd.f32 %v53, %v125
    %127 = vmatmul.f32.gmra.mxu0 %v60
    %v128 = vpop.f32.mrf.mxu0
    %v129 = vadd.f32 %v53, %v128
    %130 = vmatmul.f32.gmra.mxu0 %v63
    %v131 = vpop.f32.mrf.mxu0
    %v132 = vadd.f32 %v53, %v131
    %133 = vmatmul.f32.gmra.mxu0 %v66
    %v134 = vpop.f32.mrf.mxu0
    %v135 = vadd.f32 %v53, %v134
    %136 = vmatmul.f32.gmra.mxu0 %v69
    %v137 = vpop.f32.mrf.mxu0
    %v138 = vadd.f32 %v53, %v137
    %139 = vmatmul.f32.gmra.mxu0 %v72
    %v140 = vpop.f32.mrf.mxu0
    %v141 = vadd.f32 %v53, %v140
    %142 = vmatmul.f32.gmra.mxu0 %v75
    %v143 = vpop.f32.mrf.mxu0
    %v144 = vadd.f32 %v53, %v143
    %145 = vmatmul.f32.gmra.mxu0 %v78
    %v146 = vpop.f32.mrf.mxu0
    %v147 = vadd.f32 %v53, %v146
    %148 = vmatmul.f32.gmra.mxu0 %v81
    %v149 = vpop.f32.mrf.mxu0
    %v150 = vadd.f32 %v53, %v149
    %151 = vmatmul.f32.gmra.mxu0 %v84
    %v152 = vpop.f32.mrf.mxu0
    %v153 = vadd.f32 %v53, %v152
    %154 = vmatmul.f32.gmra.mxu0 %v87
    %v155 = vpop.f32.mrf.mxu0
    %v156 = vadd.f32 %v53, %v155
    %157 = vmatmul.f32.gmra.mxu0 %v90
    %v158 = vpop.f32.mrf.mxu0
    %v159 = vadd.f32 %v53, %v158
    %160 = vmatmul.f32.gmra.mxu0 %v93
    %v161 = vpop.f32.mrf.mxu0
    %v162 = vadd.f32 %v53, %v161
    %163 = vmatmul.f32.gmra.mxu0 %v96
    %v164 = vpop.f32.mrf.mxu0
    %v165 = vadd.f32 %v53, %v164
    %166 = vmatmul.f32.gmra.mxu0 %v99
    %v167 = vpop.f32.mrf.mxu0
    %v168 = vadd.f32 %v53, %v167
    %169 = vmatmul.f32.gmra.mxu0 %v102
    %v170 = vpop.f32.mrf.mxu0
    %v171 = vadd.f32 %v53, %v170
    %172 = vdwg.mxu0
    %v173 = vmax.f32 %v126, 0.0
    %v174 = vmax.f32 %v129, 0.0
    %v175 = vmax.f32 %v132, 0.0
    %v176 = vmax.f32 %v135, 0.0
    %v177 = vmax.f32 %v138, 0.0
    %v178 = vmax.f32 %v141, 0.0
    %v179 = vmax.f32 %v144, 0.0
    %v180 = vmax.f32 %v147, 0.0
    %v181 = vmax.f32 %v150, 0.0
    %v182 = vmax.f32 %v153, 0.0
    %v183 = vmax.f32 %v156, 0.0
    %v184 = vmax.f32 %v159, 0.0
    %v185 = vmax.f32 %v162, 0.0
    %v186 = vmax.f32 %v165, 0.0
    %v187 = vmax.f32 %v168, 0.0
    %v188 = vmax.f32 %v171, 0.0
    %v189 = vld [vmem:[%s3] sm:$0x1]
    %v191 = vperm.slane %v189, 0
    %v193 = vmul.f32 %v173, %v191
    %v194 = vmul.f32 %v174, %v191
    %v195 = vmul.f32 %v175, %v191
    %v196 = vmul.f32 %v176, %v191
    %v197 = vmul.f32 %v177, %v191
    %v198 = vmul.f32 %v178, %v191
    %v199 = vmul.f32 %v179, %v191
    %v200 = vmul.f32 %v180, %v191
    %v201 = vmul.f32 %v181, %v191
    %v202 = vmul.f32 %v182, %v191
    %v203 = vmul.f32 %v183, %v191
    %v204 = vmul.f32 %v184, %v191
    %v205 = vmul.f32 %v185, %v191
    %v206 = vmul.f32 %v186, %v191
    %v207 = vmul.f32 %v187, %v191
    %v208 = vmul.f32 %v188, %v191
    %vm209 = vcmask 523264
    %v210 = vsel %vm209, %v193, 0.0
    %211 = vadd.xlane.f32.xlu0 %v210
    %v212 = vpop.xlane.xlu0 %211
    %v213 = vsel %vm209, %v194, 0.0
    %214 = vadd.xlane.f32.xlu0 %v213
    %v215 = vpop.xlane.xlu0 %214
    %v216 = vsel %vm209, %v195, 0.0
    %217 = vadd.xlane.f32.xlu0 %v216
    %v218 = vpop.xlane.xlu0 %217
    %v219 = vsel %vm209, %v196, 0.0
    %220 = vadd.xlane.f32.xlu0 %v219
    %v221 = vpop.xlane.xlu0 %220
    %v222 = vsel %vm209, %v197, 0.0
    %223 = vadd.xlane.f32.xlu0 %v222
    %v224 = vpop.xlane.xlu0 %223
    %v225 = vsel %vm209, %v198, 0.0
    %226 = vadd.xlane.f32.xlu0 %v225
    %v227 = vpop.xlane.xlu0 %226
    %v228 = vsel %vm209, %v199, 0.0
    %229 = vadd.xlane.f32.xlu0 %v228
    %v230 = vpop.xlane.xlu0 %229
    %v231 = vsel %vm209, %v200, 0.0
    %232 = vadd.xlane.f32.xlu0 %v231
    %v233 = vpop.xlane.xlu0 %232
    %v234 = vsel %vm209, %v201, 0.0
    %235 = vadd.xlane.f32.xlu0 %v234
    %v236 = vpop.xlane.xlu0 %235
    %v237 = vsel %vm209, %v202, 0.0
    %238 = vadd.xlane.f32.xlu0 %v237
    %v239 = vpop.xlane.xlu0 %238
    %v240 = vsel %vm209, %v203, 0.0
    %241 = vadd.xlane.f32.xlu0 %v240
    %v242 = vpop.xlane.xlu0 %241
    %v243 = vsel %vm209, %v204, 0.0
    %244 = vadd.xlane.f32.xlu0 %v243
    %v245 = vpop.xlane.xlu0 %244
    %v246 = vsel %vm209, %v205, 0.0
    %247 = vadd.xlane.f32.xlu0 %v246
    %v248 = vpop.xlane.xlu0 %247
    %v249 = vsel %vm209, %v206, 0.0
    %250 = vadd.xlane.f32.xlu0 %v249
    %v251 = vpop.xlane.xlu0 %250
    %v252 = vsel %vm209, %v207, 0.0
    %253 = vadd.xlane.f32.xlu0 %v252
    %v254 = vpop.xlane.xlu0 %253
    %v255 = vsel %vm209, %v208, 0.0
    %256 = vadd.xlane.f32.xlu0 %v255
    %v257 = vpop.xlane.xlu0 %256
    %258 = vxpose.xlu0.b32.start [1/16] %v212, 128
    %259 = vxpose.xlu0.b32.cont [2/16] %v215, 128
    %260 = vxpose.xlu0.b32.cont [3/16] %v218, 128
    %261 = vxpose.xlu0.b32.cont [4/16] %v221, 128
    %262 = vxpose.xlu0.b32.cont [5/16] %v224, 128
    %263 = vxpose.xlu0.b32.cont [6/16] %v227, 128
    %264 = vxpose.xlu0.b32.cont [7/16] %v230, 128
    %265 = vxpose.xlu0.b32.cont [8/16] %v233, 128
    %266 = vxpose.xlu0.b32.cont [9/16] %v236, 128
    %267 = vxpose.xlu0.b32.cont [10/16] %v239, 128
    %268 = vxpose.xlu0.b32.cont [11/16] %v242, 128
    %269 = vxpose.xlu0.b32.cont [12/16] %v245, 128
    %270 = vxpose.xlu0.b32.cont [13/16] %v248, 128
    %271 = vxpose.xlu0.b32.cont [14/16] %v251, 128
    %272 = vxpose.xlu0.b32.cont [15/16] %v254, 128
    %273 = vxpose.xlu0.b32.end [16/16] %v257, 128
    %v274 = vpop.trf.xlu0
    %v275 = vpop.trf.xlu0
    %v276 = vpop.trf.xlu0
    %v277 = vpop.trf.xlu0
    %v278 = vpop.trf.xlu0
    %v279 = vpop.trf.xlu0
    %v280 = vpop.trf.xlu0
    %v281 = vpop.trf.xlu0
    %v282 = vpop.trf.xlu0
    %v283 = vpop.trf.xlu0
    %v284 = vpop.trf.xlu0
    %v285 = vpop.trf.xlu0
    %v286 = vpop.trf.xlu0
    %v287 = vpop.trf.xlu0
    %v288 = vpop.trf.xlu0
    %v289 = vpop.trf.xlu0
    %s290 = sld [smem:[#allocation2]]
    %v291 = vstv %s290
    %v292 = vadd.f32 %v274, %v291
    %v293 = vsub.f32 0.0, %v292
    %v294 = vmul.f32 %v293, 1.442695
    %v295 = vpow.pop %v294
    %v296 = vadd.f32 %v295, 1.0
    %v297 = vrcp.pop %v296
    %v298 = vmul.f32 %v296, %v297
    %v299 = vsub.f32 1.0, %v298
    %v300 = vmul.f32 %v297, %v299
    %v301 = vadd.f32 %v297, %v300
    %vm302 = vweird.f32 %v296
    %vm303 = vweird.f32 %v297
    %vm304 = vmor %vm302, %vm303
    %v305 = vsel %vm304, %v297, %v301
    %v306 = vand.u32 2147483647, %v296
    %vm307 = vcmp.eq.f32.partialorder %v306, 8.507059e+37
    %v308 = vand.u32 %v296, 2147483648
    %v309 = vor.u32 1.1754944e-38, %v308
    %v310 = vsel %vm307, %v309, %v305
    %311 = vst [vmem:[#allocation3] sm:$0x1] %v310
    // Predicated region
    $region22: #{tpu_custom_call.1} parent=1 // pred_check
      _
    $region23: #{tpu_custom_call.1} parent=1 // pred_check_branch
      %313 = sbr.rel (0) target = $region25
    $region24: #{tpu_custom_call.1} parent=1 // pred_region
      %315 = vsyncadd [#allocation4], 0
      %s317 = sshll.u32 [#allocation3], 4
      %s318 = int_to_ptr.vmem [resolvable:$true] %s317
      %s319 = sshll.u32 %s5, 4
      %s320 = int_to_ptr.hbm [resolvable:$true] %s319
      %322 = dma.vmem_to_hbm [thread:$0]  %s318, 16, %s320, [#allocation4]
    $region25: #{tpu_custom_call.1} parent=1 // pred_fallthru
      _
    // Predicated region
    $region26: #{tpu_custom_call.1} parent=1 // pred_check
      _
    $region27: #{tpu_custom_call.1} parent=1 // pred_check_branch
      %324 = sbr.rel (0) target = $region29
    $region28: #{tpu_custom_call.1} parent=1 // pred_region
      %326 = dma.done [#allocation4], 16
    $region29: #{tpu_custom_call.1} parent=1 // pred_fallthru
      _
    %327 = vsyncpa [#allocation4], 1

</llo_original>
